<compile_context>
chip_gen: v5e
topology: v5e:2x2
jax: 0.10.0
libtpu: 0.0.40
codegen_flags: <defaults>
</compile_context>

<pallas_src>
import functools

import jax
import jax.numpy as jnp
import numpy as np
from jax.experimental import pallas as pl
from jax.experimental.pallas import tpu as pltpu


def _ru16(n):
    return ((n + 15) // 16) * 16


def _param_layout(S, A, H):
    """16-row-aligned segment offsets inside the packed bf16 weight buffer."""
    o_w1s = 0
    o_w1a = o_w1s + _ru16(S)
    o_w2 = o_w1a + _ru16(A)
    o_w3 = o_w2 + _ru16(H)
    rows = o_w3 + _ru16(H)
    return (o_w1s, o_w1a, o_w2, o_w3), rows


def _pack_params(params):
    """Pack 7 weight/bias arrays into one bf16 weight buffer + one f32 bias buffer."""
    S, H = params["w1s"].shape
    A = params["w1a"].shape[0]
    (o_w1s, o_w1a, o_w2, o_w3), rows = _param_layout(S, A, H)

    wpack = jnp.zeros((rows, H), jnp.bfloat16)
    wpack = wpack.at[o_w1s:o_w1s + S, :].set(params["w1s"].astype(jnp.bfloat16))
    wpack = wpack.at[o_w1a:o_w1a + A, :].set(params["w1a"].astype(jnp.bfloat16))
    wpack = wpack.at[o_w2:o_w2 + H, :].set(params["w2"].astype(jnp.bfloat16))
    # w3 is (H, S); zero-pad its columns to H so every segment shares the lane width.
    wpack = wpack.at[o_w3:o_w3 + H, :S].set(params["w3"].astype(jnp.bfloat16))

    bpack = jnp.zeros((3, H), jnp.float32)
    bpack = bpack.at[0, :].set(params["b1"][0].astype(jnp.float32))
    bpack = bpack.at[1, :].set(params["b2"][0].astype(jnp.float32))
    bpack = bpack.at[2, :S].set(params["b3"][0].astype(jnp.float32))
    return wpack, bpack


def _multistep_kernel(
    state_ref,     # (TB, S)    VMEM f32
    actions_ref,   # (TB, T*A)  VMEM f32 (time axis flattened into lanes)
    targets_ref,   # (TB, T*S)  VMEM f32
    wpack_ref,     # (rows, H)  VMEM bf16 packed weights
    bpack_ref,     # (3, H)     VMEM f32  packed biases
    out_ref,       # (1, 8, 128) VMEM f32: per-tile partial loss, splatted (lane-dense store)
    *,
    discount,
    num_steps,
    s_dim,
    a_dim,
    h_dim,
    inv_bs,        # 1 / (B_total * S): MSE mean factor over the FULL batch
    layout,        # (o_w1s, o_w1a, o_w2, o_w3)
):
    S, A, H = s_dim, a_dim, h_dim
    o_w1s, o_w1a, o_w2, o_w3 = layout
    TB = state_ref.shape[0]

    # Hoisted, loop-invariant weight slices (bf16 -> MXU-native operands).
    w1s = wpack_ref[o_w1s:o_w1s + S, :]          # (S, H)
    w1a = wpack_ref[o_w1a:o_w1a + A, :]          # (A, H)
    w2 = wpack_ref[o_w2:o_w2 + H, :]             # (H, H)
    w3p = wpack_ref[o_w3:o_w3 + H, :]            # (H, H), cols S..H-1 are zero padding

    # Biases stay f32 (elementwise path); rely on implicit (1,H)+(TB,H) broadcasting.
    b1 = bpack_ref[0:1, :]                       # (1, H)
    b2 = bpack_ref[1:2, :]                       # (1, H)
    b3 = bpack_ref[2:3, :S]                      # (1, S)

    pred = state_ref[...]                        # (TB, S) f32 rollout carry
    sq_acc = jnp.zeros((TB, S), jnp.float32)     # discount-weighted squared-error accumulator

    # Statically unrolled rollout. discount**i is a compile-time constant per step; the
    # action projection is off the carry chain and overlaps with the previous step's tail.
    for i in range(num_steps):
        a_i = actions_ref[:, i * A:(i + 1) * A].astype(jnp.bfloat16)          # (TB, A)
        a_proj = jnp.dot(a_i, w1a, preferred_element_type=jnp.float32) + b1   # (TB, H)

        h1 = jnp.dot(pred.astype(jnp.bfloat16), w1s,
                     preferred_element_type=jnp.float32)
        h1 = jnp.maximum(h1 + a_proj, 0.0)
        h2 = jnp.dot(h1.astype(jnp.bfloat16), w2,
                     preferred_element_type=jnp.float32)
        h2 = jnp.maximum(h2 + b2, 0.0)
        delta = jnp.dot(h2.astype(jnp.bfloat16), w3p,
                        preferred_element_type=jnp.float32)                   # (TB, H)
        pred = pred + delta[:, :S] + b3                                       # (TB, S)

        diff = pred - targets_ref[:, i * S:(i + 1) * S]
        sq_acc = sq_acc + jnp.float32(discount ** i) * (diff * diff)

    # Single cross-lane reduction, off the per-step critical path.
    total = jnp.float32(inv_bs) * jnp.sum(sq_acc)
    # Lane-dense unmasked store of the per-tile partial; wrapper reads [:, 0, 0].
    out_ref[...] = jnp.full(out_ref.shape, total, dtype=jnp.float32)


def multi_step_loss(state, actions, target_states, params, discount=0.99, batch_tile=256):
    """Pallas implementation of MultiStepLoss.forward with a fixed residual MLP model."""
    B, S = state.shape
    assert actions.ndim == 3
    _, num_steps, A = actions.shape
    H = params["w2"].shape[0]

    # Batch tile: must divide B and satisfy the sublane rule (multiple of 8 or == B).
    if B % batch_tile == 0 and (batch_tile % 8 == 0 or batch_tile == B):
        tb = batch_tile
    else:
        tb = B
    num_tiles = B // tb

    # Contiguous trailing-dim reshapes (pure metadata, no transpose / HBM copy).
    actions_flat = actions.reshape(B, num_steps * A).astype(jnp.float32)
    targets_flat = target_states.reshape(B, num_steps * S).astype(jnp.float32)
    wpack, bpack = _pack_params(params)
    layout, _ = _param_layout(S, A, H)

    kernel = functools.partial(
        _multistep_kernel,
        discount=float(discount), num_steps=int(num_steps),
        s_dim=S, a_dim=A, h_dim=H,
        inv_bs=1.0 / float(B * S),
        layout=layout,
    )

    # VMEM budget: double-buffered batch tiles + resident params + headroom (v7x-safe).
    tile_bytes = tb * (S + num_steps * A + num_steps * S) * 4
    param_bytes = wpack.size * 2 + bpack.size * 4
    vmem_limit = int(max(8 * 1024 * 1024, 4 * tile_bytes + 2 * param_bytes + 2 * 1024 * 1024))

    out = pl.pallas_call(
        kernel,
        out_shape=jax.ShapeDtypeStruct((num_tiles, 8, 128), jnp.float32),
        grid=(num_tiles,),
        in_specs=[
            pl.BlockSpec((tb, S), lambda i: (i, 0)),
            pl.BlockSpec((tb, num_steps * A), lambda i: (i, 0)),
            pl.BlockSpec((tb, num_steps * S), lambda i: (i, 0)),
            pl.BlockSpec(wpack.shape, lambda i: (0, 0)),   # resident across all tiles
            pl.BlockSpec(bpack.shape, lambda i: (0, 0)),
        ],
        out_specs=pl.BlockSpec((1, 8, 128), lambda i: (i, 0, 0)),
        compiler_params=pltpu.CompilerParams(
            dimension_semantics=("parallel",),
            vmem_limit_bytes=vmem_limit,
        ),
    )(state.astype(jnp.float32), actions_flat, targets_flat, wpack, bpack)

    # Sum the per-tile partial discounted losses.
    return jnp.sum(out[:, 0, 0])


def reference_loss(state, actions, target_states, params, discount=0.99):
    """Pure-JAX f32 reference mirroring the torch forward exactly."""
    def model(s, a):
        h1 = jax.nn.relu(s @ params["w1s"] + a @ params["w1a"] + params["b1"])
        h2 = jax.nn.relu(h1 @ params["w2"] + params["b2"])
        return s + h2 @ params["w3"] + params["b3"]

    pred = state
    total = jnp.float32(0.0)
    T = actions.shape[1]
    for i in range(T):
        pred = model(pred, actions[:, i, :])
        loss_i = jnp.mean((pred - target_states[:, i, :]) ** 2)
        total = total + jnp.float32(discount ** i) * loss_i
    return total


def make_params(key, state_dim, action_dim, hidden):
    ks = jax.random.split(key, 6)
    scale = 0.1
    return {
        "w1s": scale * jax.random.normal(ks[0], (state_dim, hidden), jnp.float32),
        "w1a": scale * jax.random.normal(ks[1], (action_dim, hidden), jnp.float32),
        "b1": scale * jax.random.normal(ks[2], (1, hidden), jnp.float32),
        "w2": scale * jax.random.normal(ks[3], (hidden, hidden), jnp.float32),
        "b2": scale * jax.random.normal(ks[4], (1, hidden), jnp.float32),
        "w3": scale * jax.random.normal(ks[5], (hidden, state_dim), jnp.float32),
        "b3": jnp.zeros((1, state_dim), jnp.float32),
    }


if __name__ == "__main__":
    B, T, S, A, H = 16, 6, 4, 4, 32
    discount = 0.99

    key = jax.random.PRNGKey(0)
    k_state, k_act, k_tgt, k_par = jax.random.split(key, 4)

    state = jax.random.normal(k_state, (B, S), jnp.float32)
    actions = jax.random.normal(k_act, (B, T, A), jnp.float32)
    target_states = jax.random.normal(k_tgt, (B, T, S), jnp.float32)
    params = make_params(k_par, S, A, H)

    # batch_tile=8 -> 2 grid tiles, exercising the parallel batch-tile path.
    loss_pallas = jax.block_until_ready(
        multi_step_loss(state, actions, target_states, params, discount, batch_tile=8)
    )
    loss_ref = jax.block_until_ready(
        reference_loss(state, actions, target_states, params, discount)
    )

    # Tolerance accounts for bf16 matmul operands (f32 accumulation) vs the pure-f32 reference.
    if not np.allclose(np.asarray(loss_pallas), np.asarray(loss_ref), rtol=2e-2, atol=1e-3):
        raise AssertionError(f"mismatch: pallas={loss_pallas} ref={loss_ref}")

    print("KERNEL_OK")
</pallas_src>

<mosaic_0001>
module attributes {stable_mosaic.version = 11 : i64} {
  func.func @_multistep_kernel(%arg0: i32, %arg1: memref<8x4xf32, #tpu.memory_space<vmem>>, %arg2: memref<8x24xf32, #tpu.memory_space<vmem>>, %arg3: memref<8x24xf32, #tpu.memory_space<vmem>>, %arg4: memref<96x32xbf16, #tpu.memory_space<vmem>>, %arg5: memref<3x32xf32, #tpu.memory_space<vmem>>, %arg6: memref<1x8x128xf32, #tpu.memory_space<vmem>>) attributes {dimension_semantics = [#tpu.dimension_semantics<parallel>], iteration_bounds = array<i64: 2>, scalar_prefetch = 0 : i64, scratch_operands = 0 : i64, tpu.core_type = #tpu.core_type<tc>, window_params = [{transform_indices = @transform_0, window_bounds = array<i64: 8, 4>}, {transform_indices = @transform_1, window_bounds = array<i64: 8, 24>}, {transform_indices = @transform_2, window_bounds = array<i64: 8, 24>}, {pipeline_mode = #tpu.pipeline_mode<synchronous>, transform_indices = @transform_3, window_bounds = array<i64: 96, 32>}, {pipeline_mode = #tpu.pipeline_mode<synchronous>, transform_indices = @transform_4, window_bounds = array<i64: 3, 32>}, {transform_indices = @transform_5, window_bounds = array<i64: 1, 8, 128>}]} {
    %c0 = arith.constant 0 : index
    %c0_0 = arith.constant 0 : index
    %0 = vector.load %arg4[%c0, %c0_0] : memref<96x32xbf16, #tpu.memory_space<vmem>>, vector<4x32xbf16>
    %c16 = arith.constant 16 : index
    %c0_1 = arith.constant 0 : index
    %1 = vector.load %arg4[%c16, %c0_1] : memref<96x32xbf16, #tpu.memory_space<vmem>>, vector<4x32xbf16>
    %c32 = arith.constant 32 : index
    %c0_2 = arith.constant 0 : index
    %2 = vector.load %arg4[%c32, %c0_2] : memref<96x32xbf16, #tpu.memory_space<vmem>>, vector<32x32xbf16>
    %c64 = arith.constant 64 : index
    %c0_3 = arith.constant 0 : index
    %3 = vector.load %arg4[%c64, %c0_3] : memref<96x32xbf16, #tpu.memory_space<vmem>>, vector<32x32xbf16>
    %c0_4 = arith.constant 0 : index
    %c0_5 = arith.constant 0 : index
    %4 = vector.load %arg5[%c0_4, %c0_5] : memref<3x32xf32, #tpu.memory_space<vmem>>, vector<1x32xf32>
    %c1 = arith.constant 1 : index
    %c0_6 = arith.constant 0 : index
    %5 = vector.load %arg5[%c1, %c0_6] : memref<3x32xf32, #tpu.memory_space<vmem>>, vector<1x32xf32>
    %c2 = arith.constant 2 : index
    %c0_7 = arith.constant 0 : index
    %6 = vector.load %arg5[%c2, %c0_7] : memref<3x32xf32, #tpu.memory_space<vmem>>, vector<1x4xf32>
    %c0_8 = arith.constant 0 : index
    %c0_9 = arith.constant 0 : index
    %7 = vector.load %arg1[%c0_8, %c0_9] : memref<8x4xf32, #tpu.memory_space<vmem>>, vector<8x4xf32>
    %cst = arith.constant 0.000000e+00 : f32
    %8 = vector.broadcast %cst : f32 to vector<8x4xf32>
    %c0_10 = arith.constant 0 : index
    %c0_11 = arith.constant 0 : index
    %9 = vector.load %arg2[%c0_10, %c0_11] : memref<8x24xf32, #tpu.memory_space<vmem>>, vector<8x4xf32>
    %10 = arith.truncf %9 : vector<8x4xf32> to vector<8x4xbf16>
    %cst_12 = arith.constant dense<0.000000e+00> : vector<8x32xf32>
    %11 = tpu.matmul %10, %1, %cst_12 {dimension_numbers = #tpu.dot_dimension_numbers<[1], [0], [0], [1], [0, 0, 1, 1], [], []>} : vector<8x4xbf16>, vector<4x32xbf16>, vector<8x32xf32> -> vector<8x32xf32>
    %12 = vector.broadcast %4 : vector<1x32xf32> to vector<8x32xf32>
    %13 = arith.addf %11, %12 : vector<8x32xf32>
    %14 = arith.truncf %7 : vector<8x4xf32> to vector<8x4xbf16>
    %cst_13 = arith.constant dense<0.000000e+00> : vector<8x32xf32>
    %15 = tpu.matmul %14, %0, %cst_13 {dimension_numbers = #tpu.dot_dimension_numbers<[1], [0], [0], [1], [0, 0, 1, 1], [], []>} : vector<8x4xbf16>, vector<4x32xbf16>, vector<8x32xf32> -> vector<8x32xf32>
    %16 = arith.addf %15, %13 : vector<8x32xf32>
    %cst_14 = arith.constant 0.000000e+00 : f32
    %17 = vector.broadcast %cst_14 : f32 to vector<8x32xf32>
    %18 = arith.maximumf %16, %17 : vector<8x32xf32>
    %19 = arith.truncf %18 : vector<8x32xf32> to vector<8x32xbf16>
    %cst_15 = arith.constant dense<0.000000e+00> : vector<8x32xf32>
    %20 = tpu.matmul %19, %2, %cst_15 {dimension_numbers = #tpu.dot_dimension_numbers<[1], [0], [0], [1], [0, 0, 1, 1], [], []>} : vector<8x32xbf16>, vector<32x32xbf16>, vector<8x32xf32> -> vector<8x32xf32>
    %21 = vector.broadcast %5 : vector<1x32xf32> to vector<8x32xf32>
    %22 = arith.addf %20, %21 : vector<8x32xf32>
    %cst_16 = arith.constant 0.000000e+00 : f32
    %23 = vector.broadcast %cst_16 : f32 to vector<8x32xf32>
    %24 = arith.maximumf %22, %23 : vector<8x32xf32>
    %25 = arith.truncf %24 : vector<8x32xf32> to vector<8x32xbf16>
    %cst_17 = arith.constant dense<0.000000e+00> : vector<8x32xf32>
    %26 = tpu.matmul %25, %3, %cst_17 {dimension_numbers = #tpu.dot_dimension_numbers<[1], [0], [0], [1], [0, 0, 1, 1], [], []>} : vector<8x32xbf16>, vector<32x32xbf16>, vector<8x32xf32> -> vector<8x32xf32>
    %27 = vector.extract_strided_slice %26 {offsets = [0, 0], sizes = [8, 4], strides = [1, 1]} : vector<8x32xf32> to vector<8x4xf32>
    %28 = arith.addf %7, %27 : vector<8x4xf32>
    %29 = vector.broadcast %6 : vector<1x4xf32> to vector<8x4xf32>
    %30 = arith.addf %28, %29 : vector<8x4xf32>
    %c0_18 = arith.constant 0 : index
    %c0_19 = arith.constant 0 : index
    %31 = vector.load %arg3[%c0_18, %c0_19] : memref<8x24xf32, #tpu.memory_space<vmem>>, vector<8x4xf32>
    %32 = arith.subf %30, %31 : vector<8x4xf32>
    %33 = arith.mulf %32, %32 : vector<8x4xf32>
    %cst_20 = arith.constant 1.000000e+00 : f32
    %34 = vector.broadcast %cst_20 : f32 to vector<8x4xf32>
    %35 = arith.mulf %34, %33 : vector<8x4xf32>
    %36 = arith.addf %8, %35 : vector<8x4xf32>
    %c0_21 = arith.constant 0 : index
    %c4 = arith.constant 4 : index
    %37 = vector.load %arg2[%c0_21, %c4] : memref<8x24xf32, #tpu.memory_space<vmem>>, vector<8x4xf32>
    %38 = arith.truncf %37 : vector<8x4xf32> to vector<8x4xbf16>
    %cst_22 = arith.constant dense<0.000000e+00> : vector<8x32xf32>
    %39 = tpu.matmul %38, %1, %cst_22 {dimension_numbers = #tpu.dot_dimension_numbers<[1], [0], [0], [1], [0, 0, 1, 1], [], []>} : vector<8x4xbf16>, vector<4x32xbf16>, vector<8x32xf32> -> vector<8x32xf32>
    %40 = vector.broadcast %4 : vector<1x32xf32> to vector<8x32xf32>
    %41 = arith.addf %39, %40 : vector<8x32xf32>
    %42 = arith.truncf %30 : vector<8x4xf32> to vector<8x4xbf16>
    %cst_23 = arith.constant dense<0.000000e+00> : vector<8x32xf32>
    %43 = tpu.matmul %42, %0, %cst_23 {dimension_numbers = #tpu.dot_dimension_numbers<[1], [0], [0], [1], [0, 0, 1, 1], [], []>} : vector<8x4xbf16>, vector<4x32xbf16>, vector<8x32xf32> -> vector<8x32xf32>
    %44 = arith.addf %43, %41 : vector<8x32xf32>
    %cst_24 = arith.constant 0.000000e+00 : f32
    %45 = vector.broadcast %cst_24 : f32 to vector<8x32xf32>
    %46 = arith.maximumf %44, %45 : vector<8x32xf32>
    %47 = arith.truncf %46 : vector<8x32xf32> to vector<8x32xbf16>
    %cst_25 = arith.constant dense<0.000000e+00> : vector<8x32xf32>
    %48 = tpu.matmul %47, %2, %cst_25 {dimension_numbers = #tpu.dot_dimension_numbers<[1], [0], [0], [1], [0, 0, 1, 1], [], []>} : vector<8x32xbf16>, vector<32x32xbf16>, vector<8x32xf32> -> vector<8x32xf32>
    %49 = vector.broadcast %5 : vector<1x32xf32> to vector<8x32xf32>
    %50 = arith.addf %48, %49 : vector<8x32xf32>
    %cst_26 = arith.constant 0.000000e+00 : f32
    %51 = vector.broadcast %cst_26 : f32 to vector<8x32xf32>
    %52 = arith.maximumf %50, %51 : vector<8x32xf32>
    %53 = arith.truncf %52 : vector<8x32xf32> to vector<8x32xbf16>
    %cst_27 = arith.constant dense<0.000000e+00> : vector<8x32xf32>
    %54 = tpu.matmul %53, %3, %cst_27 {dimension_numbers = #tpu.dot_dimension_numbers<[1], [0], [0], [1], [0, 0, 1, 1], [], []>} : vector<8x32xbf16>, vector<32x32xbf16>, vector<8x32xf32> -> vector<8x32xf32>
    %55 = vector.extract_strided_slice %54 {offsets = [0, 0], sizes = [8, 4], strides = [1, 1]} : vector<8x32xf32> to vector<8x4xf32>
    %56 = arith.addf %30, %55 : vector<8x4xf32>
    %57 = vector.broadcast %6 : vector<1x4xf32> to vector<8x4xf32>
    %58 = arith.addf %56, %57 : vector<8x4xf32>
    %c0_28 = arith.constant 0 : index
    %c4_29 = arith.constant 4 : index
    %59 = vector.load %arg3[%c0_28, %c4_29] : memref<8x24xf32, #tpu.memory_space<vmem>>, vector<8x4xf32>
    %60 = arith.subf %58, %59 : vector<8x4xf32>
    %61 = arith.mulf %60, %60 : vector<8x4xf32>
    %cst_30 = arith.constant 9.900000e-01 : f32
    %62 = vector.broadcast %cst_30 : f32 to vector<8x4xf32>
    %63 = arith.mulf %62, %61 : vector<8x4xf32>
    %64 = arith.addf %36, %63 : vector<8x4xf32>
    %c0_31 = arith.constant 0 : index
    %c8 = arith.constant 8 : index
    %65 = vector.load %arg2[%c0_31, %c8] : memref<8x24xf32, #tpu.memory_space<vmem>>, vector<8x4xf32>
    %66 = arith.truncf %65 : vector<8x4xf32> to vector<8x4xbf16>
    %cst_32 = arith.constant dense<0.000000e+00> : vector<8x32xf32>
    %67 = tpu.matmul %66, %1, %cst_32 {dimension_numbers = #tpu.dot_dimension_numbers<[1], [0], [0], [1], [0, 0, 1, 1], [], []>} : vector<8x4xbf16>, vector<4x32xbf16>, vector<8x32xf32> -> vector<8x32xf32>
    %68 = vector.broadcast %4 : vector<1x32xf32> to vector<8x32xf32>
    %69 = arith.addf %67, %68 : vector<8x32xf32>
    %70 = arith.truncf %58 : vector<8x4xf32> to vector<8x4xbf16>
    %cst_33 = arith.constant dense<0.000000e+00> : vector<8x32xf32>
    %71 = tpu.matmul %70, %0, %cst_33 {dimension_numbers = #tpu.dot_dimension_numbers<[1], [0], [0], [1], [0, 0, 1, 1], [], []>} : vector<8x4xbf16>, vector<4x32xbf16>, vector<8x32xf32> -> vector<8x32xf32>
    %72 = arith.addf %71, %69 : vector<8x32xf32>
    %cst_34 = arith.constant 0.000000e+00 : f32
    %73 = vector.broadcast %cst_34 : f32 to vector<8x32xf32>
    %74 = arith.maximumf %72, %73 : vector<8x32xf32>
    %75 = arith.truncf %74 : vector<8x32xf32> to vector<8x32xbf16>
    %cst_35 = arith.constant dense<0.000000e+00> : vector<8x32xf32>
    %76 = tpu.matmul %75, %2, %cst_35 {dimension_numbers = #tpu.dot_dimension_numbers<[1], [0], [0], [1], [0, 0, 1, 1], [], []>} : vector<8x32xbf16>, vector<32x32xbf16>, vector<8x32xf32> -> vector<8x32xf32>
    %77 = vector.broadcast %5 : vector<1x32xf32> to vector<8x32xf32>
    %78 = arith.addf %76, %77 : vector<8x32xf32>
    %cst_36 = arith.constant 0.000000e+00 : f32
    %79 = vector.broadcast %cst_36 : f32 to vector<8x32xf32>
    %80 = arith.maximumf %78, %79 : vector<8x32xf32>
    %81 = arith.truncf %80 : vector<8x32xf32> to vector<8x32xbf16>
    %cst_37 = arith.constant dense<0.000000e+00> : vector<8x32xf32>
    %82 = tpu.matmul %81, %3, %cst_37 {dimension_numbers = #tpu.dot_dimension_numbers<[1], [0], [0], [1], [0, 0, 1, 1], [], []>} : vector<8x32xbf16>, vector<32x32xbf16>, vector<8x32xf32> -> vector<8x32xf32>
    %83 = vector.extract_strided_slice %82 {offsets = [0, 0], sizes = [8, 4], strides = [1, 1]} : vector<8x32xf32> to vector<8x4xf32>
    %84 = arith.addf %58, %83 : vector<8x4xf32>
    %85 = vector.broadcast %6 : vector<1x4xf32> to vector<8x4xf32>
    %86 = arith.addf %84, %85 : vector<8x4xf32>
    %c0_38 = arith.constant 0 : index
    %c8_39 = arith.constant 8 : index
    %87 = vector.load %arg3[%c0_38, %c8_39] : memref<8x24xf32, #tpu.memory_space<vmem>>, vector<8x4xf32>
    %88 = arith.subf %86, %87 : vector<8x4xf32>
    %89 = arith.mulf %88, %88 : vector<8x4xf32>
    %cst_40 = arith.constant 0.980099976 : f32
    %90 = vector.broadcast %cst_40 : f32 to vector<8x4xf32>
    %91 = arith.mulf %90, %89 : vector<8x4xf32>
    %92 = arith.addf %64, %91 : vector<8x4xf32>
    %c0_41 = arith.constant 0 : index
    %c12 = arith.constant 12 : index
    %93 = vector.load %arg2[%c0_41, %c12] : memref<8x24xf32, #tpu.memory_space<vmem>>, vector<8x4xf32>
    %94 = arith.truncf %93 : vector<8x4xf32> to vector<8x4xbf16>
    %cst_42 = arith.constant dense<0.000000e+00> : vector<8x32xf32>
    %95 = tpu.matmul %94, %1, %cst_42 {dimension_numbers = #tpu.dot_dimension_numbers<[1], [0], [0], [1], [0, 0, 1, 1], [], []>} : vector<8x4xbf16>, vector<4x32xbf16>, vector<8x32xf32> -> vector<8x32xf32>
    %96 = vector.broadcast %4 : vector<1x32xf32> to vector<8x32xf32>
    %97 = arith.addf %95, %96 : vector<8x32xf32>
    %98 = arith.truncf %86 : vector<8x4xf32> to vector<8x4xbf16>
    %cst_43 = arith.constant dense<0.000000e+00> : vector<8x32xf32>
    %99 = tpu.matmul %98, %0, %cst_43 {dimension_numbers = #tpu.dot_dimension_numbers<[1], [0], [0], [1], [0, 0, 1, 1], [], []>} : vector<8x4xbf16>, vector<4x32xbf16>, vector<8x32xf32> -> vector<8x32xf32>
    %100 = arith.addf %99, %97 : vector<8x32xf32>
    %cst_44 = arith.constant 0.000000e+00 : f32
    %101 = vector.broadcast %cst_44 : f32 to vector<8x32xf32>
    %102 = arith.maximumf %100, %101 : vector<8x32xf32>
    %103 = arith.truncf %102 : vector<8x32xf32> to vector<8x32xbf16>
    %cst_45 = arith.constant dense<0.000000e+00> : vector<8x32xf32>
    %104 = tpu.matmul %103, %2, %cst_45 {dimension_numbers = #tpu.dot_dimension_numbers<[1], [0], [0], [1], [0, 0, 1, 1], [], []>} : vector<8x32xbf16>, vector<32x32xbf16>, vector<8x32xf32> -> vector<8x32xf32>
    %105 = vector.broadcast %5 : vector<1x32xf32> to vector<8x32xf32>
    %106 = arith.addf %104, %105 : vector<8x32xf32>
    %cst_46 = arith.constant 0.000000e+00 : f32
    %107 = vector.broadcast %cst_46 : f32 to vector<8x32xf32>
    %108 = arith.maximumf %106, %107 : vector<8x32xf32>
    %109 = arith.truncf %108 : vector<8x32xf32> to vector<8x32xbf16>
    %cst_47 = arith.constant dense<0.000000e+00> : vector<8x32xf32>
    %110 = tpu.matmul %109, %3, %cst_47 {dimension_numbers = #tpu.dot_dimension_numbers<[1], [0], [0], [1], [0, 0, 1, 1], [], []>} : vector<8x32xbf16>, vector<32x32xbf16>, vector<8x32xf32> -> vector<8x32xf32>
    %111 = vector.extract_strided_slice %110 {offsets = [0, 0], sizes = [8, 4], strides = [1, 1]} : vector<8x32xf32> to vector<8x4xf32>
    %112 = arith.addf %86, %111 : vector<8x4xf32>
    %113 = vector.broadcast %6 : vector<1x4xf32> to vector<8x4xf32>
    %114 = arith.addf %112, %113 : vector<8x4xf32>
    %c0_48 = arith.constant 0 : index
    %c12_49 = arith.constant 12 : index
    %115 = vector.load %arg3[%c0_48, %c12_49] : memref<8x24xf32, #tpu.memory_space<vmem>>, vector<8x4xf32>
    %116 = arith.subf %114, %115 : vector<8x4xf32>
    %117 = arith.mulf %116, %116 : vector<8x4xf32>
    %cst_50 = arith.constant 9.702990e-01 : f32
    %118 = vector.broadcast %cst_50 : f32 to vector<8x4xf32>
    %119 = arith.mulf %118, %117 : vector<8x4xf32>
    %120 = arith.addf %92, %119 : vector<8x4xf32>
    %c0_51 = arith.constant 0 : index
    %c16_52 = arith.constant 16 : index
    %121 = vector.load %arg2[%c0_51, %c16_52] : memref<8x24xf32, #tpu.memory_space<vmem>>, vector<8x4xf32>
    %122 = arith.truncf %121 : vector<8x4xf32> to vector<8x4xbf16>
    %cst_53 = arith.constant dense<0.000000e+00> : vector<8x32xf32>
    %123 = tpu.matmul %122, %1, %cst_53 {dimension_numbers = #tpu.dot_dimension_numbers<[1], [0], [0], [1], [0, 0, 1, 1], [], []>} : vector<8x4xbf16>, vector<4x32xbf16>, vector<8x32xf32> -> vector<8x32xf32>
    %124 = vector.broadcast %4 : vector<1x32xf32> to vector<8x32xf32>
    %125 = arith.addf %123, %124 : vector<8x32xf32>
    %126 = arith.truncf %114 : vector<8x4xf32> to vector<8x4xbf16>
    %cst_54 = arith.constant dense<0.000000e+00> : vector<8x32xf32>
    %127 = tpu.matmul %126, %0, %cst_54 {dimension_numbers = #tpu.dot_dimension_numbers<[1], [0], [0], [1], [0, 0, 1, 1], [], []>} : vector<8x4xbf16>, vector<4x32xbf16>, vector<8x32xf32> -> vector<8x32xf32>
    %128 = arith.addf %127, %125 : vector<8x32xf32>
    %cst_55 = arith.constant 0.000000e+00 : f32
    %129 = vector.broadcast %cst_55 : f32 to vector<8x32xf32>
    %130 = arith.maximumf %128, %129 : vector<8x32xf32>
    %131 = arith.truncf %130 : vector<8x32xf32> to vector<8x32xbf16>
    %cst_56 = arith.constant dense<0.000000e+00> : vector<8x32xf32>
    %132 = tpu.matmul %131, %2, %cst_56 {dimension_numbers = #tpu.dot_dimension_numbers<[1], [0], [0], [1], [0, 0, 1, 1], [], []>} : vector<8x32xbf16>, vector<32x32xbf16>, vector<8x32xf32> -> vector<8x32xf32>
    %133 = vector.broadcast %5 : vector<1x32xf32> to vector<8x32xf32>
    %134 = arith.addf %132, %133 : vector<8x32xf32>
    %cst_57 = arith.constant 0.000000e+00 : f32
    %135 = vector.broadcast %cst_57 : f32 to vector<8x32xf32>
    %136 = arith.maximumf %134, %135 : vector<8x32xf32>
    %137 = arith.truncf %136 : vector<8x32xf32> to vector<8x32xbf16>
    %cst_58 = arith.constant dense<0.000000e+00> : vector<8x32xf32>
    %138 = tpu.matmul %137, %3, %cst_58 {dimension_numbers = #tpu.dot_dimension_numbers<[1], [0], [0], [1], [0, 0, 1, 1], [], []>} : vector<8x32xbf16>, vector<32x32xbf16>, vector<8x32xf32> -> vector<8x32xf32>
    %139 = vector.extract_strided_slice %138 {offsets = [0, 0], sizes = [8, 4], strides = [1, 1]} : vector<8x32xf32> to vector<8x4xf32>
    %140 = arith.addf %114, %139 : vector<8x4xf32>
    %141 = vector.broadcast %6 : vector<1x4xf32> to vector<8x4xf32>
    %142 = arith.addf %140, %141 : vector<8x4xf32>
    %c0_59 = arith.constant 0 : index
    %c16_60 = arith.constant 16 : index
    %143 = vector.load %arg3[%c0_59, %c16_60] : memref<8x24xf32, #tpu.memory_space<vmem>>, vector<8x4xf32>
    %144 = arith.subf %142, %143 : vector<8x4xf32>
    %145 = arith.mulf %144, %144 : vector<8x4xf32>
    %cst_61 = arith.constant 9.605960e-01 : f32
    %146 = vector.broadcast %cst_61 : f32 to vector<8x4xf32>
    %147 = arith.mulf %146, %145 : vector<8x4xf32>
    %148 = arith.addf %120, %147 : vector<8x4xf32>
    %c0_62 = arith.constant 0 : index
    %c20 = arith.constant 20 : index
    %149 = vector.load %arg2[%c0_62, %c20] : memref<8x24xf32, #tpu.memory_space<vmem>>, vector<8x4xf32>
    %150 = arith.truncf %149 : vector<8x4xf32> to vector<8x4xbf16>
    %cst_63 = arith.constant dense<0.000000e+00> : vector<8x32xf32>
    %151 = tpu.matmul %150, %1, %cst_63 {dimension_numbers = #tpu.dot_dimension_numbers<[1], [0], [0], [1], [0, 0, 1, 1], [], []>} : vector<8x4xbf16>, vector<4x32xbf16>, vector<8x32xf32> -> vector<8x32xf32>
    %152 = vector.broadcast %4 : vector<1x32xf32> to vector<8x32xf32>
    %153 = arith.addf %151, %152 : vector<8x32xf32>
    %154 = arith.truncf %142 : vector<8x4xf32> to vector<8x4xbf16>
    %cst_64 = arith.constant dense<0.000000e+00> : vector<8x32xf32>
    %155 = tpu.matmul %154, %0, %cst_64 {dimension_numbers = #tpu.dot_dimension_numbers<[1], [0], [0], [1], [0, 0, 1, 1], [], []>} : vector<8x4xbf16>, vector<4x32xbf16>, vector<8x32xf32> -> vector<8x32xf32>
    %156 = arith.addf %155, %153 : vector<8x32xf32>
    %cst_65 = arith.constant 0.000000e+00 : f32
    %157 = vector.broadcast %cst_65 : f32 to vector<8x32xf32>
    %158 = arith.maximumf %156, %157 : vector<8x32xf32>
    %159 = arith.truncf %158 : vector<8x32xf32> to vector<8x32xbf16>
    %cst_66 = arith.constant dense<0.000000e+00> : vector<8x32xf32>
    %160 = tpu.matmul %159, %2, %cst_66 {dimension_numbers = #tpu.dot_dimension_numbers<[1], [0], [0], [1], [0, 0, 1, 1], [], []>} : vector<8x32xbf16>, vector<32x32xbf16>, vector<8x32xf32> -> vector<8x32xf32>
    %161 = vector.broadcast %5 : vector<1x32xf32> to vector<8x32xf32>
    %162 = arith.addf %160, %161 : vector<8x32xf32>
    %cst_67 = arith.constant 0.000000e+00 : f32
    %163 = vector.broadcast %cst_67 : f32 to vector<8x32xf32>
    %164 = arith.maximumf %162, %163 : vector<8x32xf32>
    %165 = arith.truncf %164 : vector<8x32xf32> to vector<8x32xbf16>
    %cst_68 = arith.constant dense<0.000000e+00> : vector<8x32xf32>
    %166 = tpu.matmul %165, %3, %cst_68 {dimension_numbers = #tpu.dot_dimension_numbers<[1], [0], [0], [1], [0, 0, 1, 1], [], []>} : vector<8x32xbf16>, vector<32x32xbf16>, vector<8x32xf32> -> vector<8x32xf32>
    %167 = vector.extract_strided_slice %166 {offsets = [0, 0], sizes = [8, 4], strides = [1, 1]} : vector<8x32xf32> to vector<8x4xf32>
    %168 = arith.addf %142, %167 : vector<8x4xf32>
    %169 = vector.broadcast %6 : vector<1x4xf32> to vector<8x4xf32>
    %170 = arith.addf %168, %169 : vector<8x4xf32>
    %c0_69 = arith.constant 0 : index
    %c20_70 = arith.constant 20 : index
    %171 = vector.load %arg3[%c0_69, %c20_70] : memref<8x24xf32, #tpu.memory_space<vmem>>, vector<8x4xf32>
    %172 = arith.subf %170, %171 : vector<8x4xf32>
    %173 = arith.mulf %172, %172 : vector<8x4xf32>
    %cst_71 = arith.constant 9.509900e-01 : f32
    %174 = vector.broadcast %cst_71 : f32 to vector<8x4xf32>
    %175 = arith.mulf %174, %173 : vector<8x4xf32>
    %176 = arith.addf %148, %175 : vector<8x4xf32>
    %177 = vector.shape_cast %176 : vector<8x4xf32> to vector<1x8x4xf32>
    %cst_72 = arith.constant dense<0.000000e+00> : vector<1xf32>
    %178 = vector.multi_reduction <add>, %177, %cst_72 [1, 2] : vector<1x8x4xf32> to vector<1xf32>
    %179 = vector.shape_cast %178 : vector<1xf32> to vector<1x1x1xf32>
    %180 = vector.extract %179[0, 0, 0] : f32 from vector<1x1x1xf32>
    %cst_73 = arith.constant 1.562500e-02 : f32
    %181 = arith.mulf %cst_73, %180 : f32
    %182 = vector.broadcast %181 : f32 to vector<1x8x128xf32>
    %c0_74 = arith.constant 0 : index
    %c0_75 = arith.constant 0 : index
    %c0_76 = arith.constant 0 : index
    %183 = vector.load %arg6[%c0_74, %c0_75, %c0_76] : memref<1x8x128xf32, #tpu.memory_space<vmem>>, vector<1x8x128xf32>
    tpu.vector_store %arg6[%c0_74, %c0_75, %c0_76], %182 {strides = array<i32>} : memref<1x8x128xf32, #tpu.memory_space<vmem>>, vector<1x8x128xf32>,
    return
  }
  func.func @transform_0(%arg0: i32) -> (i32, i32) {
    %c0_i32 = arith.constant 0 : i32
    %c0_i32_0 = arith.constant 0 : i32
    return %arg0, %c0_i32 : i32, i32
  }
  func.func @transform_1(%arg0: i32) -> (i32, i32) {
    %c0_i32 = arith.constant 0 : i32
    %c0_i32_0 = arith.constant 0 : i32
    return %arg0, %c0_i32 : i32, i32
  }
  func.func @transform_2(%arg0: i32) -> (i32, i32) {
    %c0_i32 = arith.constant 0 : i32
    %c0_i32_0 = arith.constant 0 : i32
    return %arg0, %c0_i32 : i32, i32
  }
  func.func @transform_3(%arg0: i32) -> (i32, i32) {
    %c0_i32 = arith.constant 0 : i32
    %c0_i32_0 = arith.constant 0 : i32
    %c0_i32_1 = arith.constant 0 : i32
    return %c0_i32, %c0_i32_0 : i32, i32
  }
  func.func @transform_4(%arg0: i32) -> (i32, i32) {
    %c0_i32 = arith.constant 0 : i32
    %c0_i32_0 = arith.constant 0 : i32
    %c0_i32_1 = arith.constant 0 : i32
    return %c0_i32, %c0_i32_0 : i32, i32
  }
  func.func @transform_5(%arg0: i32) -> (i32, i32, i32) {
    %c0_i32 = arith.constant 0 : i32
    %c0_i32_0 = arith.constant 0 : i32
    %c0_i32_1 = arith.constant 0 : i32
    return %arg0, %c0_i32, %c0_i32_0 : i32, i32, i32
  }
}

</mosaic_0001>

<llo_original>
// kernel: tpu_custom_call.1
$region0: #{tpu_custom_call.1}
  #allocation0 [shape = 'u32[]', space=smem, size = 0x4, offset = 0x4, fixed_abs, tag = 'smem constant byte address 0x4 - core index']
  #allocation1 [shape = 'u32[72,128]{1,0:T(1,128)}', space=vmem, size = 0x9000, scoped, tag = 'internal scratch']
  %s0 = inlined_call_operand.vmem [shape: f32[16,4], index: 0, kind: input, shape index: {}]
  %s1 = inlined_call_operand.vmem [shape: f32[16,24], index: 1, kind: input, shape index: {}]
  %s2 = inlined_call_operand.vmem [shape: f32[16,24], index: 2, kind: input, shape index: {}]
  %s3 = inlined_call_operand.vmem [shape: bf16[96,32], index: 3, kind: input, shape index: {}]
  %s4 = inlined_call_operand.vmem [shape: f32[3,32], index: 4, kind: input, shape index: {}]
  %s5 = inlined_call_operand.hbm [shape: f32[2,8,128], index: 5, kind: output, shape index: {}]
  %s6 = sld [smem:[#allocation0]]
  $region53: #{tpu_custom_call.1} parent=0
    _
  %s8 = ssub.s32 1, %s6
  %s9 = scalar_select 0, %s8, %s6
  $region1: #{tpu_custom_call.1} parent=0
    #allocation2 [shape = 'u8[8192]{0}', space=vmem, size = 0x2000, scoped, tag = 'output window, operand 0']
    #allocation3 [shape = 's32[2]{0}', space=sflag, size = 0x8, scoped, tag = 'scoped memory for tpu_custom_call.1']
    %10 = vsyncpa [#allocation3], 0
    %s11 = scalar_lea.sflag [#allocation3], 1
    %12 = vsyncpa %s11, 0
    loop: start=0, step=1, limit=4
    $region2: #{tpu_custom_call.1} parent=1 // loop_pre_header
      _
    $region3: #{tpu_custom_call.1} parent=1 // loop_header
      %s14 = sphi 0, %s18
      %p15 = scmp.ge.s32.totalorder %s14, 4
      %s24 = sphi 0, %s26
      %s27 = sphi 0, %s24
      %s28 = sphi 0, %s27
      %s44 = sphi 0, %s28
      %s50 = sphi 0, %s52
      %s53 = sphi 0, %s50
      %s54 = sphi 0, %s53
      %s70 = sphi 0, %s54
      %s76 = sphi 0, %s78
      %s79 = sphi 0, %s76
      %s80 = sphi 0, %s79
      %s96 = sphi 0, %s80
      %s100 = sphi 0, %s100
      %s102 = sphi 0, %s100
      %s103 = sphi 0, %s102
      %s117 = sphi 0, %s103
      %s121 = sphi 0, %s121
      %s123 = sphi 0, %s121
      %s124 = sphi 0, %s123
      %s138 = sphi 0, %s124
      %s144 = sphi 0, %s146
      %s147 = sphi 0, %s144
      %s148 = sphi 0, %s147
      %s164 = sphi 0, %s148
    $region4: #{tpu_custom_call.1} parent=1 // loop_header_branch
      %17 = sbr.rel (%p15) target = $region8
    $region5: #{tpu_custom_call.1} parent=1 // loop_body
      %s19 = ssub.s32 %s14, 1
      %s20 = ssub.s32 %s14, 2
      %s21 = sadd.s32 %s14, 1
      %s22 = ssub.s32 %s14, %s21
      %p23 = scmp.eq.s32.totalorder %s22, 0
      %s25 = sadd.s32 %s24, 1
      %s26 = scalar_select %p23, %s24, %s25
      %p29 = pneg %p23
      %p30 = scmp.eq.s32.totalorder %s14, 1
      %p31 = por %p29, %p30
      %p32 = scmp.ne.s32.totalorder %s24, %s27
      %p33 = scmp.eq.s32.totalorder %s14, 0
      %p34 = por %p32, %p33
      %p35 = scmp.ne.s32.totalorder %s24, %s27
      %p36 = scmp.eq.s32.totalorder %s19, 1
      %p37 = por %p35, %p36
      %p38 = scmp.ne.s32.totalorder %s27, %s28
      %p39 = scmp.eq.s32.totalorder %s19, 0
      %p40 = por %p38, %p39
      %p41 = scmp.ne.s32.totalorder %s27, %s28
      %p42 = scmp.eq.s32.totalorder %s20, 1
      %p43 = por %p41, %p42
      %p45 = scmp.ne.s32.totalorder %s28, %s44
      %p46 = scmp.eq.s32.totalorder %s20, 0
      %p47 = por %p45, %p46
      %s48 = ssub.s32 %s14, %s21
      %p49 = scmp.eq.s32.totalorder %s48, 0
      %s51 = sadd.s32 %s50, 1
      %s52 = scalar_select %p49, %s50, %s51
      %p55 = pneg %p49
      %p56 = scmp.eq.s32.totalorder %s14, 1
      %p57 = por %p55, %p56
      %p58 = scmp.ne.s32.totalorder %s50, %s53
      %p59 = scmp.eq.s32.totalorder %s14, 0
      %p60 = por %p58, %p59
      %p61 = scmp.ne.s32.totalorder %s50, %s53
      %p62 = scmp.eq.s32.totalorder %s19, 1
      %p63 = por %p61, %p62
      %p64 = scmp.ne.s32.totalorder %s53, %s54
      %p65 = scmp.eq.s32.totalorder %s19, 0
      %p66 = por %p64, %p65
      %p67 = scmp.ne.s32.totalorder %s53, %s54
      %p68 = scmp.eq.s32.totalorder %s20, 1
      %p69 = por %p67, %p68
      %p71 = scmp.ne.s32.totalorder %s54, %s70
      %p72 = scmp.eq.s32.totalorder %s20, 0
      %p73 = por %p71, %p72
      %s74 = ssub.s32 %s14, %s21
      %p75 = scmp.eq.s32.totalorder %s74, 0
      %s77 = sadd.s32 %s76, 1
      %s78 = scalar_select %p75, %s76, %s77
      %p81 = pneg %p75
      %p82 = scmp.eq.s32.totalorder %s14, 1
      %p83 = por %p81, %p82
      %p84 = scmp.ne.s32.totalorder %s76, %s79
      %p85 = scmp.eq.s32.totalorder %s14, 0
      %p86 = por %p84, %p85
      %p87 = scmp.ne.s32.totalorder %s76, %s79
      %p88 = scmp.eq.s32.totalorder %s19, 1
      %p89 = por %p87, %p88
      %p90 = scmp.ne.s32.totalorder %s79, %s80
      %p91 = scmp.eq.s32.totalorder %s19, 0
      %p92 = por %p90, %p91
      %p93 = scmp.ne.s32.totalorder %s79, %s80
      %p94 = scmp.eq.s32.totalorder %s20, 1
      %p95 = por %p93, %p94
      %p97 = scmp.ne.s32.totalorder %s80, %s96
      %p98 = scmp.eq.s32.totalorder %s20, 0
      %p99 = por %p97, %p98
      %s101 = sadd.s32 %s100, 1
      %p104 = scmp.eq.s32.totalorder %s14, 1
      %p105 = scmp.ne.s32.totalorder %s100, %s102
      %p106 = scmp.eq.s32.totalorder %s14, 0
      %p107 = por %p105, %p106
      %p108 = scmp.ne.s32.totalorder %s100, %s102
      %p109 = scmp.eq.s32.totalorder %s19, 1
      %p110 = por %p108, %p109
      %p111 = scmp.ne.s32.totalorder %s102, %s103
      %p112 = scmp.eq.s32.totalorder %s19, 0
      %p113 = por %p111, %p112
      %p114 = scmp.ne.s32.totalorder %s102, %s103
      %p115 = scmp.eq.s32.totalorder %s20, 1
      %p116 = por %p114, %p115
      %p118 = scmp.ne.s32.totalorder %s103, %s117
      %p119 = scmp.eq.s32.totalorder %s20, 0
      %p120 = por %p118, %p119
      %s122 = sadd.s32 %s121, 1
      %p125 = scmp.eq.s32.totalorder %s14, 1
      %p126 = scmp.ne.s32.totalorder %s121, %s123
      %p127 = scmp.eq.s32.totalorder %s14, 0
      %p128 = por %p126, %p127
      %p129 = scmp.ne.s32.totalorder %s121, %s123
      %p130 = scmp.eq.s32.totalorder %s19, 1
      %p131 = por %p129, %p130
      %p132 = scmp.ne.s32.totalorder %s123, %s124
      %p133 = scmp.eq.s32.totalorder %s19, 0
      %p134 = por %p132, %p133
      %p135 = scmp.ne.s32.totalorder %s123, %s124
      %p136 = scmp.eq.s32.totalorder %s20, 1
      %p137 = por %p135, %p136
      %p139 = scmp.ne.s32.totalorder %s124, %s138
      %p140 = scmp.eq.s32.totalorder %s20, 0
      %p141 = por %p139, %p140
      %s142 = ssub.s32 %s14, %s21
      %p143 = scmp.eq.s32.totalorder %s142, 0
      %s145 = sadd.s32 %s144, 1
      %s146 = scalar_select %p143, %s144, %s145
      %p149 = pneg %p143
      %p150 = scmp.eq.s32.totalorder %s14, 1
      %p151 = por %p149, %p150
      %p152 = scmp.ne.s32.totalorder %s144, %s147
      %p153 = scmp.eq.s32.totalorder %s14, 0
      %p154 = por %p152, %p153
      %p155 = scmp.ne.s32.totalorder %s144, %s147
      %p156 = scmp.eq.s32.totalorder %s19, 1
      %p157 = por %p155, %p156
      %p158 = scmp.ne.s32.totalorder %s147, %s148
      %p159 = scmp.eq.s32.totalorder %s19, 0
      %p160 = por %p158, %p159
      %p161 = scmp.ne.s32.totalorder %s147, %s148
      %p162 = scmp.eq.s32.totalorder %s20, 1
      %p163 = por %p161, %p162
      %p165 = scmp.ne.s32.totalorder %s148, %s164
      %p166 = scmp.eq.s32.totalorder %s20, 0
      %p167 = por %p165, %p166
      %p168 = scmp.le.s32.totalorder 1, %s14
      %p169 = scmp.lt.s32.totalorder %s14, 3
      %p170 = pnand %p168, %p169
      %p171 = pneg %p170
      // Predicated region
      $region9: #{tpu_custom_call.1} parent=5 // pred_check
        _
      $region10: #{tpu_custom_call.1} parent=5 // pred_check_branch
        %173 = sbr.rel (%p170) target = $region12
      $region11: #{tpu_custom_call.1} parent=5 // pred_region
        %s174 = ssub.s32 %s14, 1
        // Predicated region
        $region13: #{tpu_custom_call.1} parent=11 // pred_check
          %p175 = pneg %p113
        $region14: #{tpu_custom_call.1} parent=11 // pred_check_branch
          %177 = sbr.rel (%p175) target = $region16
        $region15: #{tpu_custom_call.1} parent=11 // pred_region
          _
        $region16: #{tpu_custom_call.1} parent=11 // pred_fallthru
          _
        // Predicated region
        $region17: #{tpu_custom_call.1} parent=11 // pred_check
          %p178 = pneg %p134
        $region18: #{tpu_custom_call.1} parent=11 // pred_check_branch
          %180 = sbr.rel (%p178) target = $region20
        $region19: #{tpu_custom_call.1} parent=11 // pred_region
          _
        $region20: #{tpu_custom_call.1} parent=11 // pred_fallthru
          _
      $region12: #{tpu_custom_call.1} parent=5 // pred_fallthru
        _
      %p181 = scmp.lt.s32.totalorder %s14, 2
      // Predicated region
      $region21: #{tpu_custom_call.1} parent=5 // pred_check
        %p182 = pneg %p181
      $region22: #{tpu_custom_call.1} parent=5 // pred_check_branch
        %184 = sbr.rel (%p182) target = $region24
      $region23: #{tpu_custom_call.1} parent=5 // pred_region
        // Predicated region
        $region25: #{tpu_custom_call.1} parent=23 // pred_check
          %p185 = pneg %p34
        $region26: #{tpu_custom_call.1} parent=23 // pred_check_branch
          %187 = sbr.rel (%p185) target = $region28
        $region27: #{tpu_custom_call.1} parent=23 // pred_region
          %p188 = scmp.lt.s32.totalorder %s14, 1
          %s189 = scalar_select %p188, %s14, 1
          %s190 = smul.addr %s189, 8
          %s191 = scalar_lea.vmem %s0, %s190
        $region28: #{tpu_custom_call.1} parent=23 // pred_fallthru
          _
        // Predicated region
        $region29: #{tpu_custom_call.1} parent=23 // pred_check
          %p192 = pneg %p60
        $region30: #{tpu_custom_call.1} parent=23 // pred_check_branch
          %194 = sbr.rel (%p192) target = $region32
        $region31: #{tpu_custom_call.1} parent=23 // pred_region
          %p195 = scmp.lt.s32.totalorder %s14, 1
          %s196 = scalar_select %p195, %s14, 1
          %s197 = smul.addr %s196, 8
          %s198 = scalar_lea.vmem %s1, %s197
        $region32: #{tpu_custom_call.1} parent=23 // pred_fallthru
          _
        // Predicated region
        $region33: #{tpu_custom_call.1} parent=23 // pred_check
          %p199 = pneg %p86
        $region34: #{tpu_custom_call.1} parent=23 // pred_check_branch
          %201 = sbr.rel (%p199) target = $region36
        $region35: #{tpu_custom_call.1} parent=23 // pred_region
          %p202 = scmp.lt.s32.totalorder %s14, 1
          %s203 = scalar_select %p202, %s14, 1
          %s204 = smul.addr %s203, 8
          %s205 = scalar_lea.vmem %s2, %s204
        $region36: #{tpu_custom_call.1} parent=23 // pred_fallthru
          _
      $region24: #{tpu_custom_call.1} parent=5 // pred_fallthru
        _
      %p206 = scmp.le.s32.totalorder 1, %s14
      %p207 = scmp.lt.s32.totalorder %s14, 3
      %p208 = pnand %p206, %p207
      %p209 = pneg %p208
      // Predicated region
      $region37: #{tpu_custom_call.1} parent=5 // pred_check
        _
      $region38: #{tpu_custom_call.1} parent=5 // pred_check_branch
        %211 = sbr.rel (%p208) target = $region40
      $region39: #{tpu_custom_call.1} parent=5 // pred_region
        %s212 = ssub.s32 %s14, 1
        %p213 = scmp.lt.s32.totalorder %s19, 1
        %s214 = scalar_select %p213, %s19, 1
        %s215 = smul.addr %s214, 8
        %s216 = scalar_lea.vmem %s0, %s215
        %p217 = pneg %p40
        %p218 = pneg %p37
        %p219 = scmp.lt.s32.totalorder %s19, 1
        %s220 = scalar_select %p219, %s19, 1
        %s221 = smul.addr %s220, 8
        %s222 = scalar_lea.vmem %s1, %s221
        %p223 = pneg %p66
        %p224 = pneg %p63
        %p225 = scmp.lt.s32.totalorder %s19, 1
        %s226 = scalar_select %p225, %s19, 1
        %s227 = smul.addr %s226, 8
        %s228 = scalar_lea.vmem %s2, %s227
        %p229 = pneg %p92
        %p230 = pneg %p89
        %p231 = pneg %p113
        %p232 = pneg %p110
        %p233 = pneg %p134
        %p234 = pneg %p131
        %p235 = pneg %p160
        %p236 = pneg %p157
        %s237 = sand.u32 %s147, 1
        %s238 = scalar_lea.sflag [#allocation3], %s237
        %s239 = sand.u32 %s147, 1
        %s240 = smul.addr %s239, 8
        %s241 = scalar_lea.vmem [#allocation2], %s240
        %p242 = scmp.lt.s32.totalorder %s19, 1
        %s243 = scalar_select %p242, %s19, 1
        %s244 = smul.addr %s243, 8
        %s245 = scalar_lea.vmem %s0, %s244
        %p246 = scmp.lt.s32.totalorder %s19, 1
        %s247 = scalar_select %p246, %s19, 1
        %s248 = smul.addr %s247, 8
        %s249 = scalar_lea.vmem %s1, %s248
        %p250 = scmp.lt.s32.totalorder %s19, 1
        %s251 = scalar_select %p250, %s19, 1
        %s252 = smul.addr %s251, 8
        %s253 = scalar_lea.vmem %s2, %s252
        %v255 = vld [vmem:[%s3] sm:$0x3]
        %v256 = vld [vmem:[%s3 + $0x8] sm:$0x3]
        %v257 = vld [vmem:[%s3 + $0x10] sm:$0xf]
        %v258 = vld [vmem:[%s3 + $0x14] sm:$0xf]
        %v259 = vld [vmem:[%s3 + $0x18] sm:$0xf]
        %v260 = vld [vmem:[%s3 + $0x1c] sm:$0xf]
        %v261 = vld [vmem:[%s3 + $0x20] sm:$0xf]
        %v262 = vld [vmem:[%s3 + $0x24] sm:$0xf]
        %v263 = vld [vmem:[%s3 + $0x28] sm:$0xf]
        %v264 = vld [vmem:[%s3 + $0x2c] sm:$0xf]
        %v265 = vld [vmem:[%s4] sm:$0x1]
        %v266 = vld [vmem:[%s4 + $0x1] sm:$0x1]
        %v267 = vld [vmem:[%s4 + $0x2] sm:$0x1]
        %v268 = vld [vmem:[%s245] sm:$0xff]
        %v269 = vld [vmem:[%s249] sm:$0xff]
        %v270 = vpack.c.bf16 %v269, %v269
        %v271 = vperm.slane %v265, 0
        %vm272 = vcmask 31744
        %v274 = vsel %vm272, %v270, 0
        %vm276 = vcmask 1041408
        %v278 = vsel %vm276, %v256, 0
        %280 = vmatpush.bf16.msra.mxu0 0
        %281 = vmatpush.bf16.msra.mxu0 0
        %282 = vmatpush.bf16.msra.mxu0 0
        %283 = vmatpush.bf16.msra.mxu0 0
        %284 = vmatpush.bf16.msra.mxu0 0
        %285 = vmatpush.bf16.msra.mxu0 0
        %286 = vmatpush.bf16.msra.mxu0 0
        %287 = vmatpush.bf16.msra.mxu0 %v278
        %288 = vmatmul.bf16.gmra.mxu0 %v274
        %v289 = vpop.f32.mrf.mxu0
        %v290 = vadd.f32 %v271, %v289
        %v291 = vpop.f32.mrf.mxu0
        %292 = vdwg.mxu0
        %v293 = vpack.c.bf16 %v268, %v268
        %v295 = vsel %vm272, %v293, 0
        %v298 = vsel %vm276, %v255, 0
        %300 = vmatpush.bf16.msra.mxu0 0
        %301 = vmatpush.bf16.msra.mxu0 0
        %302 = vmatpush.bf16.msra.mxu0 0
        %303 = vmatpush.bf16.msra.mxu0 0
        %304 = vmatpush.bf16.msra.mxu0 0
        %305 = vmatpush.bf16.msra.mxu0 0
        %306 = vmatpush.bf16.msra.mxu0 0
        %307 = vmatpush.bf16.msra.mxu0 %v298
        %308 = vmatmul.bf16.gmra.mxu0 %v295
        %v309 = vpop.f32.mrf.mxu0
        %v310 = vadd.f32 %v290, %v309
        %v311 = vpop.f32.mrf.mxu0
        %312 = vdwg.mxu0
        %v313 = vmax.f32 %v310, 0.0
        %v314 = vpack.c.bf16 %v313, %v313
        %v315 = vperm.slane %v266, 0
        %v320 = vunpack.c.l.b16 %v257
        %v321 = vunpack.c.l.b16 %v258
        %v322 = vunpack.c.l.b16 %v259
        %v323 = vunpack.c.l.b16 %v260
        %v324 = vpack.c.b16 %v321, %v320
        %v325 = vpack.c.b16 %v323, %v322
        %vm328 = vcmask 261120
        %v330 = vsel %vm328, %v314, 0
        %332 = vmatpush.bf16.msra.mxu0 0
        %333 = vmatpush.bf16.msra.mxu0 0
        %334 = vmatpush.bf16.msra.mxu0 0
        %335 = vmatpush.bf16.msra.mxu0 0
        %336 = vmatpush.bf16.msra.mxu0 0
        %337 = vmatpush.bf16.msra.mxu0 0
        %338 = vmatpush.bf16.msra.mxu0 %v325
        %339 = vmatpush.bf16.msra.mxu0 %v324
        %340 = vmatmul.bf16.gmra.mxu0 %v330
        %v341 = vpop.f32.mrf.mxu0
        %v342 = vadd.f32 %v315, %v341
        %v343 = vpop.f32.mrf.mxu0
        %344 = vdwg.mxu0
        %v345 = vmax.f32 %v342, 0.0
        %v346 = vpack.c.bf16 %v345, %v345
        %v351 = vunpack.c.l.b16 %v261
        %v352 = vunpack.c.l.b16 %v262
        %v353 = vunpack.c.l.b16 %v263
        %v354 = vunpack.c.l.b16 %v264
        %v355 = vpack.c.b16 %v352, %v351
        %v356 = vpack.c.b16 %v354, %v353
        %v360 = vsel %vm328, %v346, 0
        %362 = vmatpush.bf16.msra.mxu0 0
        %363 = vmatpush.bf16.msra.mxu0 0
        %364 = vmatpush.bf16.msra.mxu0 0
        %365 = vmatpush.bf16.msra.mxu0 0
        %366 = vmatpush.bf16.msra.mxu0 0
        %367 = vmatpush.bf16.msra.mxu0 0
        %368 = vmatpush.bf16.msra.mxu0 %v356
        %369 = vmatpush.bf16.msra.mxu0 %v355
        %370 = vmatmul.bf16.gmra.mxu0 %v360
        %v371 = vpop.f32.mrf.mxu0
        %v372 = vadd.f32 0.0, %v371
        %v373 = vpop.f32.mrf.mxu0
        %374 = vdwg.mxu0
        %v375 = vadd.f32 %v268, %v372
        %v376 = vperm.slane %v267, 0
        %v377 = vadd.f32 %v375, %v376
        %v378 = vld [vmem:[%s253] sm:$0xff]
        %v379 = vsub.f32 %v377, %v378
        %v380 = vmul.f32 %v379, %v379
        %v381 = vadd.f32 %v380, 0.0
        %383 = vrot.lane.b32.xlu0 %v270, 124
        %v384 = vpop.permute.xlu0 %383
        %v386 = vsel %vm272, %v384, 0
        %388 = vmatpush.bf16.msra.mxu0 0
        %389 = vmatpush.bf16.msra.mxu0 0
        %390 = vmatpush.bf16.msra.mxu0 0
        %391 = vmatpush.bf16.msra.mxu0 0
        %392 = vmatpush.bf16.msra.mxu0 0
        %393 = vmatpush.bf16.msra.mxu0 0
        %394 = vmatpush.bf16.msra.mxu0 0
        %395 = vmatpush.bf16.msra.mxu0 %v278
        %396 = vmatmul.bf16.gmra.mxu0 %v386
        %v397 = vpop.f32.mrf.mxu0
        %v398 = vadd.f32 %v271, %v397
        %v399 = vpop.f32.mrf.mxu0
        %400 = vdwg.mxu0
        %v401 = vpack.c.bf16 %v377, %v377
        %v403 = vsel %vm272, %v401, 0
        %405 = vmatpush.bf16.msra.mxu0 0
        %406 = vmatpush.bf16.msra.mxu0 0
        %407 = vmatpush.bf16.msra.mxu0 0
        %408 = vmatpush.bf16.msra.mxu0 0
        %409 = vmatpush.bf16.msra.mxu0 0
        %410 = vmatpush.bf16.msra.mxu0 0
        %411 = vmatpush.bf16.msra.mxu0 0
        %412 = vmatpush.bf16.msra.mxu0 %v298
        %413 = vmatmul.bf16.gmra.mxu0 %v403
        %v414 = vpop.f32.mrf.mxu0
        %v415 = vadd.f32 %v398, %v414
        %v416 = vpop.f32.mrf.mxu0
        %417 = vdwg.mxu0
        %v418 = vmax.f32 %v415, 0.0
        %v419 = vpack.c.bf16 %v418, %v418
        %v421 = vsel %vm328, %v419, 0
        %423 = vmatpush.bf16.msra.mxu0 0
        %424 = vmatpush.bf16.msra.mxu0 0
        %425 = vmatpush.bf16.msra.mxu0 0
        %426 = vmatpush.bf16.msra.mxu0 0
        %427 = vmatpush.bf16.msra.mxu0 0
        %428 = vmatpush.bf16.msra.mxu0 0
        %429 = vmatpush.bf16.msra.mxu0 %v325
        %430 = vmatpush.bf16.msra.mxu0 %v324
        %431 = vmatmul.bf16.gmra.mxu0 %v421
        %v432 = vpop.f32.mrf.mxu0
        %v433 = vadd.f32 %v315, %v432
        %v434 = vpop.f32.mrf.mxu0
        %435 = vdwg.mxu0
        %v436 = vmax.f32 %v433, 0.0
        %v437 = vpack.c.bf16 %v436, %v436
        %v439 = vsel %vm328, %v437, 0
        %441 = vmatpush.bf16.msra.mxu0 0
        %442 = vmatpush.bf16.msra.mxu0 0
        %443 = vmatpush.bf16.msra.mxu0 0
        %444 = vmatpush.bf16.msra.mxu0 0
        %445 = vmatpush.bf16.msra.mxu0 0
        %446 = vmatpush.bf16.msra.mxu0 0
        %447 = vmatpush.bf16.msra.mxu0 %v356
        %448 = vmatpush.bf16.msra.mxu0 %v355
        %449 = vmatmul.bf16.gmra.mxu0 %v439
        %v450 = vpop.f32.mrf.mxu0
        %v451 = vadd.f32 0.0, %v450
        %v452 = vpop.f32.mrf.mxu0
        %453 = vdwg.mxu0
        %v454 = vadd.f32 %v377, %v451
        %v455 = vadd.f32 %v454, %v376
        %457 = vrot.lane.b32.xlu0 %v378, 124
        %v458 = vpop.permute.xlu0 %457
        %v460 = vsub.f32 %v455, %v458
        %v461 = vmul.f32 %v460, %v460
        %v462 = vmul.f32 %v461, 0.99
        %v463 = vadd.f32 %v381, %v462
        %464 = vrot.lane.b32.xlu0 %v270, 120
        %v465 = vpop.permute.xlu0 %464
        %v467 = vsel %vm272, %v465, 0
        %469 = vmatpush.bf16.msra.mxu0 0
        %470 = vmatpush.bf16.msra.mxu0 0
        %471 = vmatpush.bf16.msra.mxu0 0
        %472 = vmatpush.bf16.msra.mxu0 0
        %473 = vmatpush.bf16.msra.mxu0 0
        %474 = vmatpush.bf16.msra.mxu0 0
        %475 = vmatpush.bf16.msra.mxu0 0
        %476 = vmatpush.bf16.msra.mxu0 %v278
        %477 = vmatmul.bf16.gmra.mxu0 %v467
        %v478 = vpop.f32.mrf.mxu0
        %v479 = vadd.f32 %v271, %v478
        %v480 = vpop.f32.mrf.mxu0
        %481 = vdwg.mxu0
        %v482 = vpack.c.bf16 %v455, %v455
        %v484 = vsel %vm272, %v482, 0
        %486 = vmatpush.bf16.msra.mxu0 0
        %487 = vmatpush.bf16.msra.mxu0 0
        %488 = vmatpush.bf16.msra.mxu0 0
        %489 = vmatpush.bf16.msra.mxu0 0
        %490 = vmatpush.bf16.msra.mxu0 0
        %491 = vmatpush.bf16.msra.mxu0 0
        %492 = vmatpush.bf16.msra.mxu0 0
        %493 = vmatpush.bf16.msra.mxu0 %v298
        %494 = vmatmul.bf16.gmra.mxu0 %v484
        %v495 = vpop.f32.mrf.mxu0
        %v496 = vadd.f32 %v479, %v495
        %v497 = vpop.f32.mrf.mxu0
        %498 = vdwg.mxu0
        %v499 = vmax.f32 %v496, 0.0
        %v500 = vpack.c.bf16 %v499, %v499
        %v502 = vsel %vm328, %v500, 0
        %504 = vmatpush.bf16.msra.mxu0 0
        %505 = vmatpush.bf16.msra.mxu0 0
        %506 = vmatpush.bf16.msra.mxu0 0
        %507 = vmatpush.bf16.msra.mxu0 0
        %508 = vmatpush.bf16.msra.mxu0 0
        %509 = vmatpush.bf16.msra.mxu0 0
        %510 = vmatpush.bf16.msra.mxu0 %v325
        %511 = vmatpush.bf16.msra.mxu0 %v324
        %512 = vmatmul.bf16.gmra.mxu0 %v502
        %v513 = vpop.f32.mrf.mxu0
        %v514 = vadd.f32 %v315, %v513
        %v515 = vpop.f32.mrf.mxu0
        %516 = vdwg.mxu0
        %v517 = vmax.f32 %v514, 0.0
        %v518 = vpack.c.bf16 %v517, %v517
        %v520 = vsel %vm328, %v518, 0
        %522 = vmatpush.bf16.msra.mxu0 0
        %523 = vmatpush.bf16.msra.mxu0 0
        %524 = vmatpush.bf16.msra.mxu0 0
        %525 = vmatpush.bf16.msra.mxu0 0
        %526 = vmatpush.bf16.msra.mxu0 0
        %527 = vmatpush.bf16.msra.mxu0 0
        %528 = vmatpush.bf16.msra.mxu0 %v356
        %529 = vmatpush.bf16.msra.mxu0 %v355
        %530 = vmatmul.bf16.gmra.mxu0 %v520
        %v531 = vpop.f32.mrf.mxu0
        %v532 = vadd.f32 0.0, %v531
        %v533 = vpop.f32.mrf.mxu0
        %534 = vdwg.mxu0
        %v535 = vadd.f32 %v455, %v532
        %v536 = vadd.f32 %v535, %v376
        %537 = vrot.lane.b32.xlu0 %v378, 120
        %v538 = vpop.permute.xlu0 %537
        %v540 = vsub.f32 %v536, %v538
        %v541 = vmul.f32 %v540, %v540
        %v542 = vmul.f32 %v541, 0.9801
        %v543 = vadd.f32 %v463, %v542
        %544 = vrot.lane.b32.xlu0 %v270, 116
        %v545 = vpop.permute.xlu0 %544
        %v547 = vsel %vm272, %v545, 0
        %549 = vmatpush.bf16.msra.mxu0 0
        %550 = vmatpush.bf16.msra.mxu0 0
        %551 = vmatpush.bf16.msra.mxu0 0
        %552 = vmatpush.bf16.msra.mxu0 0
        %553 = vmatpush.bf16.msra.mxu0 0
        %554 = vmatpush.bf16.msra.mxu0 0
        %555 = vmatpush.bf16.msra.mxu0 0
        %556 = vmatpush.bf16.msra.mxu0 %v278
        %557 = vmatmul.bf16.gmra.mxu0 %v547
        %v558 = vpop.f32.mrf.mxu0
        %v559 = vadd.f32 %v271, %v558
        %v560 = vpop.f32.mrf.mxu0
        %561 = vdwg.mxu0
        %v562 = vpack.c.bf16 %v536, %v536
        %v564 = vsel %vm272, %v562, 0
        %566 = vmatpush.bf16.msra.mxu0 0
        %567 = vmatpush.bf16.msra.mxu0 0
        %568 = vmatpush.bf16.msra.mxu0 0
        %569 = vmatpush.bf16.msra.mxu0 0
        %570 = vmatpush.bf16.msra.mxu0 0
        %571 = vmatpush.bf16.msra.mxu0 0
        %572 = vmatpush.bf16.msra.mxu0 0
        %573 = vmatpush.bf16.msra.mxu0 %v298
        %574 = vmatmul.bf16.gmra.mxu0 %v564
        %v575 = vpop.f32.mrf.mxu0
        %v576 = vadd.f32 %v559, %v575
        %v577 = vpop.f32.mrf.mxu0
        %578 = vdwg.mxu0
        %v579 = vmax.f32 %v576, 0.0
        %v580 = vpack.c.bf16 %v579, %v579
        %v582 = vsel %vm328, %v580, 0
        %584 = vmatpush.bf16.msra.mxu0 0
        %585 = vmatpush.bf16.msra.mxu0 0
        %586 = vmatpush.bf16.msra.mxu0 0
        %587 = vmatpush.bf16.msra.mxu0 0
        %588 = vmatpush.bf16.msra.mxu0 0
        %589 = vmatpush.bf16.msra.mxu0 0
        %590 = vmatpush.bf16.msra.mxu0 %v325
        %591 = vmatpush.bf16.msra.mxu0 %v324
        %592 = vmatmul.bf16.gmra.mxu0 %v582
        %v593 = vpop.f32.mrf.mxu0
        %v594 = vadd.f32 %v315, %v593
        %v595 = vpop.f32.mrf.mxu0
        %596 = vdwg.mxu0
        %v597 = vmax.f32 %v594, 0.0
        %v598 = vpack.c.bf16 %v597, %v597
        %v600 = vsel %vm328, %v598, 0
        %602 = vmatpush.bf16.msra.mxu0 0
        %603 = vmatpush.bf16.msra.mxu0 0
        %604 = vmatpush.bf16.msra.mxu0 0
        %605 = vmatpush.bf16.msra.mxu0 0
        %606 = vmatpush.bf16.msra.mxu0 0
        %607 = vmatpush.bf16.msra.mxu0 0
        %608 = vmatpush.bf16.msra.mxu0 %v356
        %609 = vmatpush.bf16.msra.mxu0 %v355
        %610 = vmatmul.bf16.gmra.mxu0 %v600
        %v611 = vpop.f32.mrf.mxu0
        %v612 = vadd.f32 0.0, %v611
        %v613 = vpop.f32.mrf.mxu0
        %614 = vdwg.mxu0
        %v615 = vadd.f32 %v536, %v612
        %v616 = vadd.f32 %v615, %v376
        %617 = vrot.lane.b32.xlu0 %v378, 116
        %v618 = vpop.permute.xlu0 %617
        %v620 = vsub.f32 %v616, %v618
        %v621 = vmul.f32 %v620, %v620
        %v622 = vmul.f32 %v621, 0.970299
        %v623 = vadd.f32 %v543, %v622
        %624 = vrot.lane.b32.xlu0 %v270, 112
        %v625 = vpop.permute.xlu0 %624
        %v627 = vsel %vm272, %v625, 0
        %629 = vmatpush.bf16.msra.mxu0 0
        %630 = vmatpush.bf16.msra.mxu0 0
        %631 = vmatpush.bf16.msra.mxu0 0
        %632 = vmatpush.bf16.msra.mxu0 0
        %633 = vmatpush.bf16.msra.mxu0 0
        %634 = vmatpush.bf16.msra.mxu0 0
        %635 = vmatpush.bf16.msra.mxu0 0
        %636 = vmatpush.bf16.msra.mxu0 %v278
        %637 = vmatmul.bf16.gmra.mxu0 %v627
        %v638 = vpop.f32.mrf.mxu0
        %v639 = vadd.f32 %v271, %v638
        %v640 = vpop.f32.mrf.mxu0
        %641 = vdwg.mxu0
        %v642 = vpack.c.bf16 %v616, %v616
        %v644 = vsel %vm272, %v642, 0
        %646 = vmatpush.bf16.msra.mxu0 0
        %647 = vmatpush.bf16.msra.mxu0 0
        %648 = vmatpush.bf16.msra.mxu0 0
        %649 = vmatpush.bf16.msra.mxu0 0
        %650 = vmatpush.bf16.msra.mxu0 0
        %651 = vmatpush.bf16.msra.mxu0 0
        %652 = vmatpush.bf16.msra.mxu0 0
        %653 = vmatpush.bf16.msra.mxu0 %v298
        %654 = vmatmul.bf16.gmra.mxu0 %v644
        %v655 = vpop.f32.mrf.mxu0
        %v656 = vadd.f32 %v639, %v655
        %v657 = vpop.f32.mrf.mxu0
        %658 = vdwg.mxu0
        %v659 = vmax.f32 %v656, 0.0
        %v660 = vpack.c.bf16 %v659, %v659
        %v662 = vsel %vm328, %v660, 0
        %664 = vmatpush.bf16.msra.mxu0 0
        %665 = vmatpush.bf16.msra.mxu0 0
        %666 = vmatpush.bf16.msra.mxu0 0
        %667 = vmatpush.bf16.msra.mxu0 0
        %668 = vmatpush.bf16.msra.mxu0 0
        %669 = vmatpush.bf16.msra.mxu0 0
        %670 = vmatpush.bf16.msra.mxu0 %v325
        %671 = vmatpush.bf16.msra.mxu0 %v324
        %672 = vmatmul.bf16.gmra.mxu0 %v662
        %v673 = vpop.f32.mrf.mxu0
        %v674 = vadd.f32 %v315, %v673
        %v675 = vpop.f32.mrf.mxu0
        %676 = vdwg.mxu0
        %v677 = vmax.f32 %v674, 0.0
        %v678 = vpack.c.bf16 %v677, %v677
        %v680 = vsel %vm328, %v678, 0
        %682 = vmatpush.bf16.msra.mxu0 0
        %683 = vmatpush.bf16.msra.mxu0 0
        %684 = vmatpush.bf16.msra.mxu0 0
        %685 = vmatpush.bf16.msra.mxu0 0
        %686 = vmatpush.bf16.msra.mxu0 0
        %687 = vmatpush.bf16.msra.mxu0 0
        %688 = vmatpush.bf16.msra.mxu0 %v356
        %689 = vmatpush.bf16.msra.mxu0 %v355
        %690 = vmatmul.bf16.gmra.mxu0 %v680
        %v691 = vpop.f32.mrf.mxu0
        %v692 = vadd.f32 0.0, %v691
        %v693 = vpop.f32.mrf.mxu0
        %694 = vdwg.mxu0
        %v695 = vadd.f32 %v616, %v692
        %v696 = vadd.f32 %v695, %v376
        %697 = vrot.lane.b32.xlu0 %v378, 112
        %v698 = vpop.permute.xlu0 %697
        %v700 = vsub.f32 %v696, %v698
        %v701 = vmul.f32 %v700, %v700
        %v702 = vmul.f32 %v701, 0.960596
        %v703 = vadd.f32 %v623, %v702
        %704 = vrot.lane.b32.xlu0 %v270, 108
        %v705 = vpop.permute.xlu0 %704
        %v707 = vsel %vm272, %v705, 0
        %709 = vmatpush.bf16.msra.mxu0 0
        %710 = vmatpush.bf16.msra.mxu0 0
        %711 = vmatpush.bf16.msra.mxu0 0
        %712 = vmatpush.bf16.msra.mxu0 0
        %713 = vmatpush.bf16.msra.mxu0 0
        %714 = vmatpush.bf16.msra.mxu0 0
        %715 = vmatpush.bf16.msra.mxu0 0
        %716 = vmatpush.bf16.msra.mxu0 %v278
        %717 = vmatmul.bf16.gmra.mxu0 %v707
        %v718 = vpop.f32.mrf.mxu0
        %v719 = vadd.f32 %v271, %v718
        %v720 = vpop.f32.mrf.mxu0
        %721 = vdwg.mxu0
        %v722 = vpack.c.bf16 %v696, %v696
        %v724 = vsel %vm272, %v722, 0
        %726 = vmatpush.bf16.msra.mxu0 0
        %727 = vmatpush.bf16.msra.mxu0 0
        %728 = vmatpush.bf16.msra.mxu0 0
        %729 = vmatpush.bf16.msra.mxu0 0
        %730 = vmatpush.bf16.msra.mxu0 0
        %731 = vmatpush.bf16.msra.mxu0 0
        %732 = vmatpush.bf16.msra.mxu0 0
        %733 = vmatpush.bf16.msra.mxu0 %v298
        %734 = vmatmul.bf16.gmra.mxu0 %v724
        %v735 = vpop.f32.mrf.mxu0
        %v736 = vadd.f32 %v719, %v735
        %v737 = vpop.f32.mrf.mxu0
        %738 = vdwg.mxu0
        %v739 = vmax.f32 %v736, 0.0
        %v740 = vpack.c.bf16 %v739, %v739
        %v742 = vsel %vm328, %v740, 0
        %744 = vmatpush.bf16.msra.mxu0 0
        %745 = vmatpush.bf16.msra.mxu0 0
        %746 = vmatpush.bf16.msra.mxu0 0
        %747 = vmatpush.bf16.msra.mxu0 0
        %748 = vmatpush.bf16.msra.mxu0 0
        %749 = vmatpush.bf16.msra.mxu0 0
        %750 = vmatpush.bf16.msra.mxu0 %v325
        %751 = vmatpush.bf16.msra.mxu0 %v324
        %752 = vmatmul.bf16.gmra.mxu0 %v742
        %v753 = vpop.f32.mrf.mxu0
        %v754 = vadd.f32 %v315, %v753
        %v755 = vpop.f32.mrf.mxu0
        %756 = vdwg.mxu0
        %v757 = vmax.f32 %v754, 0.0
        %v758 = vpack.c.bf16 %v757, %v757
        %v760 = vsel %vm328, %v758, 0
        %762 = vmatpush.bf16.msra.mxu0 0
        %763 = vmatpush.bf16.msra.mxu0 0
        %764 = vmatpush.bf16.msra.mxu0 0
        %765 = vmatpush.bf16.msra.mxu0 0
        %766 = vmatpush.bf16.msra.mxu0 0
        %767 = vmatpush.bf16.msra.mxu0 0
        %768 = vmatpush.bf16.msra.mxu0 %v356
        %769 = vmatpush.bf16.msra.mxu0 %v355
        %770 = vmatmul.bf16.gmra.mxu0 %v760
        %v771 = vpop.f32.mrf.mxu0
        %v772 = vadd.f32 0.0, %v771
        %v773 = vpop.f32.mrf.mxu0
        %774 = vdwg.mxu0
        %v775 = vadd.f32 %v696, %v772
        %v776 = vadd.f32 %v775, %v376
        %777 = vrot.lane.b32.xlu0 %v378, 108
        %v778 = vpop.permute.xlu0 %777
        %v780 = vsub.f32 %v776, %v778
        %v781 = vmul.f32 %v780, %v780
        %v782 = vmul.f32 %v781, 0.95099
        %v783 = vadd.f32 %v703, %v782
        %v784 = vsel %vm272, %v783, 0.0
        %785 = vadd.xlane.f32.xlu0 %v784
        %v786 = vpop.xlane.xlu0 %785
        %v787 = vrot.slane %v786, 4
        %v788 = vadd.f32 %v786, %v787
        %v789 = vrot.slane %v788, 2
        %v790 = vadd.f32 %v788, %v789
        %v791 = vrot.slane %v790, 1
        %v792 = vadd.f32 %v790, %v791
        %s793 = vtos %v792
        %s794 = smul.f32 %s793, 0.015625
        %v795 = vstv %s794
        %796 = vst [vmem:[%s241] sm:$0xff] %v795
        %s797 = sand.u32 %s147, 1
        %s798 = scalar_lea.sflag [#allocation3], %s797
        %s799 = sand.u32 %s147, 1
        %s800 = smul.addr %s799, 8
        %s801 = scalar_lea.vmem [#allocation2], %s800
        // Predicated region
        $region41: #{tpu_custom_call.1} parent=39 // pred_check
          %p802 = pneg %p157
        $region42: #{tpu_custom_call.1} parent=39 // pred_check_branch
          %804 = sbr.rel (%p802) target = $region44
        $region43: #{tpu_custom_call.1} parent=39 // pred_region
          %806 = vsyncadd %s798, 0
          %s807 = smul.addr %s19, 8
          %s808 = scalar_lea.hbm %s5, %s807
          %s810 = sshll.u32 %s801, 4
          %s811 = int_to_ptr.vmem [resolvable:$true] %s810
          %s812 = sshll.u32 %s808, 4
          %s813 = int_to_ptr.hbm [resolvable:$true] %s812
          %815 = dma.vmem_to_hbm [thread:$0]  %s811, 128, %s813, %s798
        $region44: #{tpu_custom_call.1} parent=39 // pred_fallthru
          _
      $region40: #{tpu_custom_call.1} parent=5 // pred_fallthru
        _
      %p816 = scmp.le.s32.totalorder 2, %s14
      // Predicated region
      $region45: #{tpu_custom_call.1} parent=5 // pred_check
        %p817 = pneg %p816
      $region46: #{tpu_custom_call.1} parent=5 // pred_check_branch
        %819 = sbr.rel (%p817) target = $region48
      $region47: #{tpu_custom_call.1} parent=5 // pred_region
        %s820 = ssub.s32 %s14, 2
        // Predicated region
        $region49: #{tpu_custom_call.1} parent=47 // pred_check
          %p821 = pneg %p163
        $region50: #{tpu_custom_call.1} parent=47 // pred_check_branch
          %823 = sbr.rel (%p821) target = $region52
        $region51: #{tpu_custom_call.1} parent=47 // pred_region
          %s824 = sand.u32 %s148, 1
          %s825 = scalar_lea.sflag [#allocation3], %s824
          %s826 = sand.u32 %s148, 1
          %s827 = smul.addr %s826, 8
          %s828 = scalar_lea.vmem [#allocation2], %s827
          %830 = dma.done %s825, 128
        $region52: #{tpu_custom_call.1} parent=47 // pred_fallthru
          _
      $region48: #{tpu_custom_call.1} parent=5 // pred_fallthru
        _
    $region6: #{tpu_custom_call.1} parent=1 // loop_footer
      %s18 = sadd.s32 1, %s14
    $region7: #{tpu_custom_call.1} parent=1 // loop_footer_branch
      %13 = sbr.rel target = $region3
    $region8: #{tpu_custom_call.1} parent=1 // loop_exit
      _
    %831 = vsyncpa [#allocation3], 1
    %s832 = scalar_lea.sflag [#allocation3], 1
    %833 = vsyncpa %s832, 1

</llo_original>
